<compile_context>
chip_gen: v7x
topology: tpu7x:2x2x1
jax: 0.10.0
libtpu: 0.0.40
codegen_flags: <defaults>
</compile_context>

<pallas_src>
import functools

import jax
import jax.numpy as jnp
from jax.experimental import pallas as pl
from jax.experimental.pallas import tpu as pltpu

GEM_EPS = 1e-6    # GeM clamp eps
L2_EPS = 1e-12    # F.normalize default eps

# ~2 MiB of f32-equivalent elements per streamed feature block: big enough to sit
# near the HBM roofline (measured tile sweeps show ~1 MiB tiles reach ~85%), small
# enough that a double-buffered bf16 input block + its f32 working set + a resident
# 2048x2048 projector stays comfortably inside v7x's 64 MiB physical VMEM.
_BLOCK_BUDGET_ELEMS = 512 * 1024


# ---------------------------------------------------------------------------
# Kernel helpers
# ---------------------------------------------------------------------------
def _l2_normalize(v):
    # x / max(||x||, eps)  ==  x * rsqrt(max(||x||^2, eps^2))   (EUP rsqrt, no divide)
    ss = jnp.sum(v * v, axis=-1, keepdims=True)
    return v * jax.lax.rsqrt(jnp.maximum(ss, jnp.float32(L2_EPS * L2_EPS)))


def _int_pow(x, n):
    # x ** n for a small static integer n via binary exponentiation (VPU only).
    acc = None
    base = x
    while n > 0:
        if n & 1:
            acc = base if acc is None else acc * base
        n >>= 1
        if n:
            base = base * base
    return acc


def _pow_p(xc, p_ref, p_static):
    """xc ** p.  Integer p -> VPU multiplies; half-integer p -> multiplies + one
    sqrt (1 EUP op instead of exp+log = 2); runtime p -> exp/log fallback."""
    if p_static is not None:
        n2 = int(round(2.0 * p_static))          # p == n2 / 2
        acc = _int_pow(xc, n2 // 2) if n2 // 2 else None
        if n2 & 1:
            s = jnp.sqrt(xc)
            acc = s if acc is None else acc * s
        return acc
    p = p_ref[0]                                 # scalar-prefetched p from SMEM
    return jnp.exp(p * jnp.log(xc))              # xc > 0 (clamped)


def _pow_inv_p(pooled, p_ref, p_static):
    """pooled ** (1/p) on the tiny (bt, C) pooled descriptor (pooled > 0)."""
    if p_static is not None:
        if p_static == 1.0:
            return pooled
        if p_static == 0.5:
            return pooled * pooled
        if p_static == 2.0:
            return jnp.sqrt(pooled)
        if p_static == 4.0:
            return jnp.sqrt(jnp.sqrt(pooled))
        return jnp.exp(jnp.log(pooled) * jnp.float32(1.0 / p_static))
    return jnp.exp(jnp.log(pooled) / p_ref[0])


def _gem_accumulate(p_ref, x_ref, acc_ref, p_static):
    """Accumulate clamp(x, eps)^p over this (h_tile, W) spatial chunk into acc (f32)."""
    @pl.when(pl.program_id(1) == 0)
    def _():
        acc_ref[...] = jnp.zeros_like(acc_ref)

    # (bt, h_tile, W, C) block, C lane-dense; upcast per tile (bf16 streams from HBM).
    x = x_ref[...].astype(jnp.float32)
    xc = jnp.maximum(x, jnp.float32(GEM_EPS))     # clamp(min=eps)
    xp = _pow_p(xc, p_ref, p_static)
    # Spatial reduce: leading (h_tile) axis then sublane (W) axis -> (bt, C), f32 acc.
    acc_ref[...] += xp.sum(axis=1).sum(axis=1)


def _gem_finalize(p_ref, acc_ref, p_static, inv_hw):
    pooled = acc_ref[...] * jnp.float32(inv_hw)   # mean over H*W (true count)
    return _l2_normalize(_pow_inv_p(pooled, p_ref, p_static))   # F.normalize(dim=1)


# ---------------------------------------------------------------------------
# Kernels
# ---------------------------------------------------------------------------
def _gem_l2_kernel(p_ref, x_ref, o_ref, acc_ref, *, p_static, inv_hw):
    _gem_accumulate(p_ref, x_ref, acc_ref, p_static)

    @pl.when(pl.program_id(1) == pl.num_programs(1) - 1)
    def _():
        o_ref[...] = _gem_finalize(p_ref, acc_ref, p_static, inv_hw)


def _gem_l2_proj_kernel(p_ref, x_ref, w_ref, b_ref, o_ref, acc_ref, *, p_static, inv_hw):
    _gem_accumulate(p_ref, x_ref, acc_ref, p_static)

    @pl.when(pl.program_id(1) == pl.num_programs(1) - 1)
    def _():
        g = _gem_finalize(p_ref, acc_ref, p_static, inv_hw)     # (bt, C) f32, unit norm
        w = w_ref[...]                                          # (C, d_out): MXU-native (K, N)
        lhs = g if w.dtype == jnp.float32 else g.astype(w.dtype)
        y = jnp.dot(lhs, w, preferred_element_type=jnp.float32)
        y = y + b_ref[...].astype(jnp.float32)
        o_ref[...] = _l2_normalize(y)                           # F.normalize(dim=1)


# ---------------------------------------------------------------------------
# Wrapper helpers
# ---------------------------------------------------------------------------
def _specialize_p(gem_p):
    """p as a Python float if trace-time known and cheaply specializable
    (integer or half-integer in [0.5, 16]); otherwise None -> runtime SMEM p."""
    try:
        pv = float(gem_p)
    except Exception:
        return None
    if 0.5 <= pv <= 16.0 and float(2.0 * pv).is_integer():
        return pv
    return None


def _pick_tiles(B, H, W, C, batch_tile, h_tile):
    """Choose (batch_tile, h_tile) from the VMEM element budget.

    Legality: the (bt, C) output block needs bt % 8 == 0 or bt == B; the
    (bt, h_tile, W, C) input block uses full W and C, so h_tile only has to
    divide H (it is a leading, untiled dim)."""
    bt_floor = min(8, B)
    if h_tile is None:
        if bt_floor * H * W * C <= _BLOCK_BUDGET_ELEMS:
            h_tile = H
        else:
            divisors = [d for d in range(1, H + 1) if H % d == 0]
            fitting = [d for d in divisors
                       if bt_floor * d * W * C <= _BLOCK_BUDGET_ELEMS]
            h_tile = max(fitting) if fitting else 1
    assert H % h_tile == 0, "h_tile must divide H"

    if batch_tile is None:
        bt = max(1, _BLOCK_BUDGET_ELEMS // (h_tile * W * C))
        bt = min(bt, 256)
    else:
        bt = batch_tile
    bt = min(bt, B)
    if bt < B:                                   # legalize for the (bt, C) output block
        bt = (bt // 8) * 8 if bt >= 8 else min(8, B)
        bt = min(bt, B)
    # Megacore: keep >=2 batch grid steps so v7x's second TensorCore gets work
    # (the batch axis is the "parallel" one); no effect on v5e/v6e (single TC).
    if batch_tile is None and bt == B and B >= 16:
        bt = max(8, (((B + 1) // 2) // 8) * 8)
    return bt, h_tile


def _vmem_limit_bytes(bt, h_tile, W, C, x_itemsize, out_dim, wb_bytes):
    """Scoped-VMEM budget from actual block sizes (+ headroom), clamped to stay
    inside v7x's 64 MiB physical VMEM (v5e/v6e have 128 MiB, so always safe)."""
    x_block = bt * h_tile * W * C
    total = 2 * x_block * x_itemsize          # double-buffered input stream
    total += 2 * x_block * 4                  # f32 upcast / pow working set
    total += bt * C * 4                       # pooled accumulator scratch
    total += 2 * bt * out_dim * 4             # output block (double-buffered)
    total += wb_bytes                         # resident projector weight + bias
    total += 4 * 1024 * 1024                  # compiler-internal scratch / spill headroom
    return int(min(max(total, 32 * 1024 * 1024), 64 * 1024 * 1024))


# ---------------------------------------------------------------------------
# Wrapper
# ---------------------------------------------------------------------------
def embedder_forward(feats, gem_p, proj_w=None, proj_b=None, *,
                     data_format="NHWC", batch_tile=None, h_tile=None,
                     weight_dtype=None):
    """GeM pool -> L2 norm [-> Linear -> L2 norm] over backbone feature maps.

    feats:         backbone output feature maps.  NHWC (B, H, W, C) is the native,
                   zero-copy path (channels lane-dense); the PyTorch NCHW layout is
                   accepted via data_format="NCHW" at the cost of one transpose.
    gem_p:         GeM exponent (the module's learnable `p`), scalar.
    proj_w/proj_b: optional projector Linear params in PyTorch layout (d_out, d_in)/(d_out,).
    weight_dtype:  optionally stream the projector weight/bias in e.g. bf16 (halves
                   weight DMA + residency; the matmul still accumulates in f32 but the
                   unit-norm descriptor is downcast to match -> small precision drop).
    Returns (B, C) or (B, d_out) float32 descriptors (== .squeeze(-1).squeeze(-1)).
    """
    # TODO(synk): the pretrained ResNet/AlexNet backbone (torchvision / torch.hub
    # weights) has no checkpoint-free Pallas equivalent; this starts from the
    # backbone's output feature maps.
    if data_format == "NCHW":
        # PyTorch-layout compatibility path: one relayout.  Prefer emitting NHWC
        # from the backbone and skipping this (this transpose is exactly the HBM
        # round trip the NHWC path avoids).
        feats = jnp.transpose(feats, (0, 2, 3, 1))
    elif data_format != "NHWC":
        raise ValueError(f"unsupported data_format: {data_format}")

    B, H, W, C = feats.shape
    inv_hw = 1.0 / (H * W)

    p_static = _specialize_p(gem_p)
    p_arr = jnp.asarray(gem_p, jnp.float32).reshape(1)

    bt, ht = _pick_tiles(B, H, W, C, batch_tile, h_tile)
    grid = (pl.cdiv(B, bt), H // ht)

    # Feature map consumed in place: (bt, h_tile, W, C) blocks, lane-dense in C,
    # streamed from HBM exactly once; spatial reduce happens in-kernel.
    # index_maps receive the scalar-prefetch ref (p) as a trailing positional arg.
    x_spec = pl.BlockSpec((bt, ht, W, C), lambda bi, hi, p: (bi, hi, 0, 0))

    if proj_w is None:
        out_dim = C
        kernel = functools.partial(_gem_l2_kernel, p_static=p_static, inv_hw=inv_hw)
        in_specs = [x_spec]
        args = (p_arr, feats)
        wb_bytes = 0
    else:
        d_out, d_in = proj_w.shape
        assert d_in == C, "projector weight must be (out_dim, in_dim=C), PyTorch style"
        w = jnp.transpose(proj_w)                 # one-time (d_in, d_out): MXU-native (K, N)
        bias = jnp.reshape(proj_b, (1, d_out))
        if weight_dtype is not None:
            w = w.astype(weight_dtype)
            bias = bias.astype(weight_dtype)
        out_dim = d_out
        kernel = functools.partial(_gem_l2_proj_kernel, p_static=p_static, inv_hw=inv_hw)
        in_specs = [
            x_spec,
            # Grid-constant blocks: fetched once (the DMA hides under the first
            # tile's GeM phase) and kept resident in VMEM across all grid steps.
            pl.BlockSpec((d_in, d_out), lambda bi, hi, p: (0, 0)),
            pl.BlockSpec((1, d_out), lambda bi, hi, p: (0, 0)),
        ]
        args = (p_arr, feats, w, bias)
        wb_bytes = w.size * w.dtype.itemsize + bias.size * bias.dtype.itemsize

    grid_spec = pltpu.PrefetchScalarGridSpec(
        num_scalar_prefetch=1,
        grid=grid,
        in_specs=in_specs,
        out_specs=pl.BlockSpec((bt, out_dim), lambda bi, hi, p: (bi, 0)),
        scratch_shapes=[pltpu.VMEM((bt, C), jnp.float32)],     # xc^p partial sums (f32)
    )
    compiler_params = pltpu.CompilerParams(
        # Batch blocks are independent ("parallel", megacore-shardable); the spatial
        # chunk axis carries the accumulator ("arbitrary", innermost).
        dimension_semantics=("parallel", "arbitrary"),
        vmem_limit_bytes=_vmem_limit_bytes(bt, ht, W, C, feats.dtype.itemsize,
                                           out_dim, wb_bytes),
    )
    return pl.pallas_call(
        kernel,
        out_shape=jax.ShapeDtypeStruct((B, out_dim), jnp.float32),
        grid_spec=grid_spec,
        compiler_params=compiler_params,
    )(*args)


# ---------------------------------------------------------------------------
# Pure-JAX reference for sanity check (NHWC)
# ---------------------------------------------------------------------------
def _ref_forward(feats_f32_nhwc, p, w=None, b=None):
    xc = jnp.maximum(feats_f32_nhwc, GEM_EPS)
    pooled = jnp.mean(xc ** jnp.float32(p), axis=(1, 2))
    g = pooled ** (1.0 / p)
    g = g / jnp.maximum(jnp.linalg.norm(g, axis=1, keepdims=True), L2_EPS)
    if w is None:
        return g
    y = g @ w.T + b
    return y / jnp.maximum(jnp.linalg.norm(y, axis=1, keepdims=True), L2_EPS)


if __name__ == "__main__":
    key = jax.random.PRNGKey(0)
    k_feat, k_w, k_b, k_feat2, k_feat3 = jax.random.split(key, 5)

    # Small synthetic "backbone output": NHWC, bf16 (what a TPU backbone emits).
    B, H, W, C = 2, 8, 8, 128
    feats = jax.random.uniform(k_feat, (B, H, W, C), jnp.float32,
                               minval=0.0, maxval=2.0).astype(jnp.bfloat16)
    feats_f32 = feats.astype(jnp.float32)       # exact values the kernel sees after upcast

    gem_p = jnp.float32(3.0)                                     # GeM: p = ones(1) * 3
    proj_w = 0.1 * jax.random.normal(k_w, (C, C), jnp.float32)   # Linear(C, C) weight
    proj_b = 0.1 * jax.random.normal(k_b, (C,), jnp.float32)     # Linear bias

    # 1) no projector, integer-p VPU fast path
    out_plain = jax.block_until_ready(embedder_forward(feats, gem_p))
    ref_plain = _ref_forward(feats_f32, 3.0)
    assert out_plain.shape == (B, C)
    assert jnp.allclose(out_plain, ref_plain, atol=1e-4, rtol=1e-4)

    # 1b) NCHW (PyTorch layout) compatibility path gives the same result
    feats_nchw = jnp.transpose(feats, (0, 3, 1, 2))
    out_nchw = jax.block_until_ready(
        embedder_forward(feats_nchw, gem_p, data_format="NCHW"))
    assert jnp.allclose(out_nchw, out_plain, atol=1e-6, rtol=1e-6)

    # 2) fused projector (f32 weight: exact-reference path)
    out_proj = jax.block_until_ready(embedder_forward(feats, gem_p, proj_w, proj_b))
    ref_proj = _ref_forward(feats_f32, 3.0, proj_w, proj_b)
    assert out_proj.shape == (B, C)
    assert jnp.allclose(out_proj, ref_proj, atol=1e-4, rtol=1e-4)

    # 2b) bf16-streamed projector weight (half the weight DMA / VMEM residency)
    out_proj_bf16 = jax.block_until_ready(
        embedder_forward(feats, gem_p, proj_w, proj_b, weight_dtype=jnp.bfloat16))
    assert jnp.allclose(out_proj_bf16, ref_proj, atol=1e-2, rtol=1e-2)

    # 3) larger batch: >=2 "parallel" batch grid steps; half-integer p (mul + sqrt path)
    B2 = 16
    feats2 = jax.random.uniform(k_feat2, (B2, H, W, C), jnp.float32,
                                minval=0.0, maxval=2.0).astype(jnp.bfloat16)
    out_half = jax.block_until_ready(embedder_forward(feats2, jnp.float32(2.5)))
    ref_half = _ref_forward(feats2.astype(jnp.float32), 2.5)
    assert out_half.shape == (B2, C)
    assert jnp.allclose(out_half, ref_half, atol=1e-4, rtol=1e-4)

    # 4) chunked spatial axis (2 "arbitrary" grid steps over H, f32 accumulator)
    #    + genuinely runtime p (no trace-time specialization -> SMEM exp/log fallback)
    B3, H3, W3 = 4, 16, 16
    feats3 = jax.random.uniform(k_feat3, (B3, H3, W3, C), jnp.float32,
                                minval=0.0, maxval=2.0).astype(jnp.bfloat16)
    out_dyn = jax.block_until_ready(
        embedder_forward(feats3, jnp.float32(2.7), h_tile=8))
    ref_dyn = _ref_forward(feats3.astype(jnp.float32), 2.7)
    assert out_dyn.shape == (B3, C)
    assert jnp.allclose(out_dyn, ref_dyn, atol=1e-4, rtol=1e-4)

    print("KERNEL_OK")
</pallas_src>

<mosaic_0001>
module attributes {stable_mosaic.version = 11 : i64} {
  func.func @_gem_l2_kernel(%arg0: i32, %arg1: i32, %arg2: memref<1xf32, #tpu.memory_space<smem>>, %arg3: memref<2x8x8x128xbf16, #tpu.memory_space<vmem>>, %arg4: memref<2x128xf32, #tpu.memory_space<vmem>>, %arg5: memref<2x128xf32, #tpu.memory_space<vmem>>) attributes {dimension_semantics = [#tpu.dimension_semantics<parallel>, #tpu.dimension_semantics<arbitrary>], iteration_bounds = array<i64: 1, 1>, scalar_prefetch = 1 : i64, scratch_operands = 1 : i64, tpu.core_type = #tpu.core_type<tc>, window_params = [{transform_indices = @transform_0, window_bounds = array<i64: 2, 8, 8, 128>}, {transform_indices = @transform_1, window_bounds = array<i64: 2, 128>}]} {
    %c0_i32 = arith.constant 0 : i32
    %0 = arith.cmpi eq, %arg1, %c0_i32 : i32
    %1 = arith.extui %0 : i1 to i32
    %c0_i32_0 = arith.constant 0 : i32
    %2 = arith.cmpi ne, %1, %c0_i32_0 : i32
    scf.if %2 {
      %cst_12 = arith.constant 0.000000e+00 : f32
      %17 = vector.broadcast %cst_12 : f32 to vector<2x128xf32>
      %c0_13 = arith.constant 0 : index
      %c0_14 = arith.constant 0 : index
      %18 = vector.load %arg5[%c0_13, %c0_14] : memref<2x128xf32, #tpu.memory_space<vmem>>, vector<2x128xf32>
      tpu.vector_store %arg5[%c0_13, %c0_14], %17 {strides = array<i32>} : memref<2x128xf32, #tpu.memory_space<vmem>>, vector<2x128xf32>,
    } else {
    }
    %c0 = arith.constant 0 : index
    %c0_1 = arith.constant 0 : index
    %c0_2 = arith.constant 0 : index
    %c0_3 = arith.constant 0 : index
    %3 = vector.load %arg3[%c0, %c0_1, %c0_2, %c0_3] : memref<2x8x8x128xbf16, #tpu.memory_space<vmem>>, vector<2x8x8x128xbf16>
    %4 = arith.extf %3 : vector<2x8x8x128xbf16> to vector<2x8x8x128xf32>
    %cst = arith.constant 9.99999997E-7 : f32
    %5 = vector.broadcast %cst : f32 to vector<2x8x8x128xf32>
    %6 = arith.maximumf %4, %5 : vector<2x8x8x128xf32>
    %7 = arith.mulf %6, %6 : vector<2x8x8x128xf32>
    %8 = arith.mulf %6, %7 : vector<2x8x8x128xf32>
    %c0_4 = arith.constant 0 : index
    %c0_5 = arith.constant 0 : index
    %9 = vector.load %arg5[%c0_4, %c0_5] : memref<2x128xf32, #tpu.memory_space<vmem>>, vector<2x128xf32>
    %cst_6 = arith.constant dense<0.000000e+00> : vector<2x8x128xf32>
    %10 = vector.multi_reduction <add>, %8, %cst_6 [1] : vector<2x8x8x128xf32> to vector<2x8x128xf32>
    %cst_7 = arith.constant dense<0.000000e+00> : vector<2x128xf32>
    %11 = vector.multi_reduction <add>, %10, %cst_7 [1] : vector<2x8x128xf32> to vector<2x128xf32>
    %12 = arith.addf %9, %11 : vector<2x128xf32>
    %c0_8 = arith.constant 0 : index
    %c0_9 = arith.constant 0 : index
    %13 = vector.load %arg5[%c0_8, %c0_9] : memref<2x128xf32, #tpu.memory_space<vmem>>, vector<2x128xf32>
    tpu.vector_store %arg5[%c0_8, %c0_9], %12 {strides = array<i32>} : memref<2x128xf32, #tpu.memory_space<vmem>>, vector<2x128xf32>,
    %c0_i32_10 = arith.constant 0 : i32
    %14 = arith.cmpi eq, %arg1, %c0_i32_10 : i32
    %15 = arith.extui %14 : i1 to i32
    %c0_i32_11 = arith.constant 0 : i32
    %16 = arith.cmpi ne, %15, %c0_i32_11 : i32
    scf.if %16 {
      %c0_12 = arith.constant 0 : index
      %c0_13 = arith.constant 0 : index
      %17 = vector.load %arg5[%c0_12, %c0_13] : memref<2x128xf32, #tpu.memory_space<vmem>>, vector<2x128xf32>
      %cst_14 = arith.constant 1.562500e-02 : f32
      %18 = vector.broadcast %cst_14 : f32 to vector<2x128xf32>
      %19 = arith.mulf %17, %18 : vector<2x128xf32>
      %20 = math.log %19 : vector<2x128xf32>
      %cst_15 = arith.constant 0.333333343 : f32
      %21 = vector.broadcast %cst_15 : f32 to vector<2x128xf32>
      %22 = arith.mulf %20, %21 : vector<2x128xf32>
      %23 = math.exp %22 : vector<2x128xf32>
      %24 = arith.mulf %23, %23 : vector<2x128xf32>
      %cst_16 = arith.constant dense<0.000000e+00> : vector<2xf32>
      %25 = vector.multi_reduction <add>, %24, %cst_16 [1] : vector<2x128xf32> to vector<2xf32>
      %26 = vector.shape_cast %25 : vector<2xf32> to vector<2x1xf32>
      %cst_17 = arith.constant 1.000000e-24 : f32
      %27 = vector.broadcast %cst_17 : f32 to vector<2x1xf32>
      %28 = arith.maximumf %26, %27 : vector<2x1xf32>
      %29 = math.rsqrt %28 : vector<2x1xf32>
      %30 = vector.broadcast %29 : vector<2x1xf32> to vector<2x128xf32>
      %31 = arith.mulf %23, %30 : vector<2x128xf32>
      %c0_18 = arith.constant 0 : index
      %c0_19 = arith.constant 0 : index
      %32 = vector.load %arg4[%c0_18, %c0_19] : memref<2x128xf32, #tpu.memory_space<vmem>>, vector<2x128xf32>
      tpu.vector_store %arg4[%c0_18, %c0_19], %31 {strides = array<i32>} : memref<2x128xf32, #tpu.memory_space<vmem>>, vector<2x128xf32>,
    } else {
    }
    return
  }
  func.func @transform_0(%arg0: i32, %arg1: i32, %arg2: memref<1xf32, #tpu.memory_space<smem>>) -> (i32, i32, i32, i32) {
    %c0_i32 = arith.constant 0 : i32
    %c0_i32_0 = arith.constant 0 : i32
    %c0_i32_1 = arith.constant 0 : i32
    return %arg0, %arg1, %c0_i32, %c0_i32_0 : i32, i32, i32, i32
  }
  func.func @transform_1(%arg0: i32, %arg1: i32, %arg2: memref<1xf32, #tpu.memory_space<smem>>) -> (i32, i32) {
    %c0_i32 = arith.constant 0 : i32
    %c0_i32_0 = arith.constant 0 : i32
    return %arg0, %c0_i32 : i32, i32
  }
}

</mosaic_0001>

<llo_original>
// kernel: tpu_custom_call.1
$region0: #{tpu_custom_call.1}
  #allocation0 [shape = 'u32[]', space=smem, size = 0x4, offset = 0x4, fixed_abs, tag = 'smem constant byte address 0x4 - core index']
  #allocation1 [shape = 'u32[144,128]{1,0:T(1,128)}', space=vmem, size = 0x12000, scoped, tag = 'internal scratch']
  #allocation2 [shape = 'f32[2,128]{1,0:T(2,128)}', space=vmem, size = 0x400, scoped, tag = 'scratch operand']
  #allocation3 [shape = 's32[1]{0}', space=sflag, size = 0x4, scoped, tag = 'scoped memory for tpu_custom_call.1']
  #allocation4 [shape = 'f32[1]{0:T(128)S(6)}', space=smem, size = 0x200, scoped, tag = 'prefetched SMEM operand 0']
  %s0 = inlined_call_operand.<no memory space> [shape: f32[1], index: 0, kind: input, shape index: {}]
  %s1 = inlined_call_operand.hbm [shape: bf16[2,8,8,128], index: 1, kind: input, shape index: {}]
  %s2 = inlined_call_operand.hbm [shape: f32[2,128], index: 2, kind: output, shape index: {}]
  %s3 = sld [smem:[#allocation0]]
  $region26: #{tpu_custom_call.1} parent=0
    _
  %s5 = ssub.s32 1, %s3
  %s6 = scalar_select 0, %s5, %s3
  %7 = sst [smem:[#allocation4]] %s0
  $region1: #{tpu_custom_call.1} parent=0
    #allocation5 [shape = 'u8[32768]{0}', space=vmem, size = 0x8000, scoped, tag = 'input window, operand 1, single buffered']
    #allocation6 [shape = 's32[1]{0}', space=sflag, size = 0x4, scoped, tag = 'scoped memory for tpu_custom_call.1']
    #allocation7 [shape = 's32[1]{0}', space=sflag, size = 0x4, scoped, tag = 'scoped memory for tpu_custom_call.1']
    #allocation8 [shape = 'u8[1024]{0}', space=vmem, size = 0x400, scoped, tag = 'output window, operand 0, single buffered']
    %8 = vsyncpa [#allocation6], 0
    %9 = vsyncpa [#allocation7], 0
    // Predicated region
    $region2: #{tpu_custom_call.1} parent=1 // pred_check
      _
    $region3: #{tpu_custom_call.1} parent=1 // pred_check_branch
      %11 = sbr.rel (0) target = $region5
    $region4: #{tpu_custom_call.1} parent=1 // pred_region
      %s13 = ssub.s32 1024, 1024
      %14 = vsyncadd [#allocation6], %s13
      %s15 = sshll.u32 [#allocation5], 4
      %s16 = int_to_ptr.vmem [resolvable:$true] %s15
      %21 = dma.hbm_to_vmem [thread:$0]  %s1, 1024, %s16, [#allocation6], 64, 64, 4
    $region5: #{tpu_custom_call.1} parent=1 // pred_fallthru
      _
    // Predicated region
    $region6: #{tpu_custom_call.1} parent=1 // pred_check
      _
    $region7: #{tpu_custom_call.1} parent=1 // pred_check_branch
      %23 = sbr.rel (0) target = $region9
    $region8: #{tpu_custom_call.1} parent=1 // pred_region
      %24 = dma.done [#allocation6], 1024
    $region9: #{tpu_custom_call.1} parent=1 // pred_fallthru
      _
    %p25 = scmp.eq.s32.totalorder 0, 0
    // Predicated region
    $region10: #{tpu_custom_call.1} parent=1 // pred_check
      %p26 = pneg %p25
    $region11: #{tpu_custom_call.1} parent=1 // pred_check_branch
      %28 = sbr.rel (%p26) target = $region13
    $region12: #{tpu_custom_call.1} parent=1 // pred_region
      %29 = vst [vmem:[#allocation2] sm:$0x3] 0.0
    $region13: #{tpu_custom_call.1} parent=1 // pred_fallthru
      _
    %v30 = vld [vmem:[#allocation5] sm:$0xf]
    %v31 = vld [vmem:[#allocation5 + $0x4] sm:$0xf]
    %v32 = vld [vmem:[#allocation5 + $0x8] sm:$0xf]
    %v33 = vld [vmem:[#allocation5 + $0xc] sm:$0xf]
    %v34 = vld [vmem:[#allocation5 + $0x10] sm:$0xf]
    %v35 = vld [vmem:[#allocation5 + $0x14] sm:$0xf]
    %v36 = vld [vmem:[#allocation5 + $0x18] sm:$0xf]
    %v37 = vld [vmem:[#allocation5 + $0x1c] sm:$0xf]
    %v38 = vld [vmem:[#allocation5 + $0x20] sm:$0xf]
    %v39 = vld [vmem:[#allocation5 + $0x24] sm:$0xf]
    %v40 = vld [vmem:[#allocation5 + $0x28] sm:$0xf]
    %v41 = vld [vmem:[#allocation5 + $0x2c] sm:$0xf]
    %v42 = vld [vmem:[#allocation5 + $0x30] sm:$0xf]
    %v43 = vld [vmem:[#allocation5 + $0x34] sm:$0xf]
    %v44 = vld [vmem:[#allocation5 + $0x38] sm:$0xf]
    %v45 = vld [vmem:[#allocation5 + $0x3c] sm:$0xf]
    %v46 = vunpack.c.l.bf16 %v30
    %v47 = vunpack.c.l.bf16 %v31
    %v48 = vunpack.c.l.bf16 %v32
    %v49 = vunpack.c.l.bf16 %v33
    %v50 = vunpack.c.l.bf16 %v34
    %v51 = vunpack.c.l.bf16 %v35
    %v52 = vunpack.c.l.bf16 %v36
    %v53 = vunpack.c.l.bf16 %v37
    %v54 = vunpack.c.l.bf16 %v38
    %v55 = vunpack.c.l.bf16 %v39
    %v56 = vunpack.c.l.bf16 %v40
    %v57 = vunpack.c.l.bf16 %v41
    %v58 = vunpack.c.l.bf16 %v42
    %v59 = vunpack.c.l.bf16 %v43
    %v60 = vunpack.c.l.bf16 %v44
    %v61 = vunpack.c.l.bf16 %v45
    %v62 = vmax.f32 %v46, 1e-06
    %v63 = vmax.f32 %v47, 1e-06
    %v64 = vmax.f32 %v48, 1e-06
    %v65 = vmax.f32 %v49, 1e-06
    %v66 = vmax.f32 %v50, 1e-06
    %v67 = vmax.f32 %v51, 1e-06
    %v68 = vmax.f32 %v52, 1e-06
    %v69 = vmax.f32 %v53, 1e-06
    %v70 = vmax.f32 %v54, 1e-06
    %v71 = vmax.f32 %v55, 1e-06
    %v72 = vmax.f32 %v56, 1e-06
    %v73 = vmax.f32 %v57, 1e-06
    %v74 = vmax.f32 %v58, 1e-06
    %v75 = vmax.f32 %v59, 1e-06
    %v76 = vmax.f32 %v60, 1e-06
    %v77 = vmax.f32 %v61, 1e-06
    %v78 = vmul.f32 %v62, %v62
    %v79 = vmul.f32 %v63, %v63
    %v80 = vmul.f32 %v64, %v64
    %v81 = vmul.f32 %v65, %v65
    %v82 = vmul.f32 %v66, %v66
    %v83 = vmul.f32 %v67, %v67
    %v84 = vmul.f32 %v68, %v68
    %v85 = vmul.f32 %v69, %v69
    %v86 = vmul.f32 %v70, %v70
    %v87 = vmul.f32 %v71, %v71
    %v88 = vmul.f32 %v72, %v72
    %v89 = vmul.f32 %v73, %v73
    %v90 = vmul.f32 %v74, %v74
    %v91 = vmul.f32 %v75, %v75
    %v92 = vmul.f32 %v76, %v76
    %v93 = vmul.f32 %v77, %v77
    %v94 = vmul.f32 %v62, %v78
    %v95 = vmul.f32 %v63, %v79
    %v96 = vmul.f32 %v64, %v80
    %v97 = vmul.f32 %v65, %v81
    %v98 = vmul.f32 %v66, %v82
    %v99 = vmul.f32 %v67, %v83
    %v100 = vmul.f32 %v68, %v84
    %v101 = vmul.f32 %v69, %v85
    %v102 = vmul.f32 %v70, %v86
    %v103 = vmul.f32 %v71, %v87
    %v104 = vmul.f32 %v72, %v88
    %v105 = vmul.f32 %v73, %v89
    %v106 = vmul.f32 %v74, %v90
    %v107 = vmul.f32 %v75, %v91
    %v108 = vmul.f32 %v76, %v92
    %v109 = vmul.f32 %v77, %v93
    %v110 = vld [vmem:[#allocation2] sm:$0x3]
    %v111 = vadd.f32 %v94, %v95
    %v112 = vadd.f32 %v111, %v96
    %v113 = vadd.f32 %v112, %v97
    %v114 = vadd.f32 %v113, %v98
    %v115 = vadd.f32 %v114, %v99
    %v116 = vadd.f32 %v115, %v100
    %v117 = vadd.f32 %v116, %v101
    %v118 = vadd.f32 %v102, %v103
    %v119 = vadd.f32 %v118, %v104
    %v120 = vadd.f32 %v119, %v105
    %v121 = vadd.f32 %v120, %v106
    %v122 = vadd.f32 %v121, %v107
    %v123 = vadd.f32 %v122, %v108
    %v124 = vadd.f32 %v123, %v109
    %v125 = vrot.slane %v117, 4
    %v126 = vadd.f32 %v117, %v125
    %v127 = vrot.slane %v126, 2
    %v128 = vadd.f32 %v126, %v127
    %v129 = vrot.slane %v128, 1
    %v130 = vadd.f32 %v128, %v129
    %v131 = vrot.slane %v124, 4
    %v132 = vadd.f32 %v124, %v131
    %v133 = vrot.slane %v132, 2
    %v134 = vadd.f32 %v132, %v133
    %v135 = vrot.slane %v134, 1
    %v136 = vadd.f32 %v134, %v135
    %vm139 = vcmask 1041409
    %v140 = vsel %vm139, %v136, %v130
    %v142 = vadd.f32 %v110, %v140
    %143 = vst [vmem:[#allocation2] sm:$0x3] %v142
    // Predicated region
    $region14: #{tpu_custom_call.1} parent=1 // pred_check
      %p144 = pneg %p25
    $region15: #{tpu_custom_call.1} parent=1 // pred_check_branch
      %146 = sbr.rel (%p144) target = $region17
    $region16: #{tpu_custom_call.1} parent=1 // pred_region
      %v147 = vld [vmem:[#allocation2] sm:$0x3]
      %v148 = vmul.f32 %v147, 0.015625
      %v149 = vlog2.pop %v148
      %v150 = vmul.f32 %v149, 0.6931472
      %v151 = vmul.f32 %v150, 0.33333334
      %v152 = vmul.f32 %v151, 1.442695
      %v153 = vpow.pop %v152
      %v154 = vmul.f32 %v153, %v153
      %vm155 = vcmask 1041408
      %v156 = vsel %vm155, %v154, 0.0
      %157 = vadd.xlane.f32.xlu0 %v156
      %v158 = vpop.xlane.xlu0 %157
      %v159 = vmax.f32 %v158, 1e-24
      %v160 = vrsqrt.pop %v159
      %v161 = vmul.f32 %v153, %v160
      %162 = vst [vmem:[#allocation8] sm:$0x3] %v161
    $region17: #{tpu_custom_call.1} parent=1 // pred_fallthru
      _
    // Predicated region
    $region18: #{tpu_custom_call.1} parent=1 // pred_check
      _
    $region19: #{tpu_custom_call.1} parent=1 // pred_check_branch
      %164 = sbr.rel (0) target = $region21
    $region20: #{tpu_custom_call.1} parent=1 // pred_region
      %s166 = ssub.s32 32, 32
      %167 = vsyncadd [#allocation7], %s166
      %s169 = sshll.u32 [#allocation8], 4
      %s170 = int_to_ptr.vmem [resolvable:$true] %s169
      %172 = dma.vmem_to_hbm [thread:$0]  %s170, 32, %s2, [#allocation7]
    $region21: #{tpu_custom_call.1} parent=1 // pred_fallthru
      _
    // Predicated region
    $region22: #{tpu_custom_call.1} parent=1 // pred_check
      _
    $region23: #{tpu_custom_call.1} parent=1 // pred_check_branch
      %174 = sbr.rel (0) target = $region25
    $region24: #{tpu_custom_call.1} parent=1 // pred_region
      %175 = dma.done [#allocation7], 32
    $region25: #{tpu_custom_call.1} parent=1 // pred_fallthru
      _
    %176 = vsyncpa [#allocation6], 1
    %177 = vsyncpa [#allocation7], 1

</llo_original>
